<compile_context>
chip_gen: v6e
topology: v6e:2x2x1
jax: 0.10.0
libtpu: 0.0.40
codegen_flags: <defaults>
</compile_context>

<pallas_src>
import functools

import jax
import jax.numpy as jnp
from jax.experimental import pallas as pl
from jax.experimental.pallas import tpu as pltpu


def _round_up(x, m):
    return (x + m - 1) // m * m


def _mlp_decoder5_kernel(
    x1_ref, x2_ref,
    w1a_ref, w1b_ref, b1_ref,
    w2_ref, b2_ref,
    w3_ref, b3_ref,
    w4_ref, b4_ref,
    w5_ref, b5_ref,
    out_ref,
    *, compute_dtype,
):
    cd = compute_dtype

    # line_1: split GEMM over the concat axis — avoids materializing
    # cat([x1, x2], dim=1) in VMEM.
    h = (jnp.dot(x1_ref[...].astype(cd), w1a_ref[...].astype(cd),
                 preferred_element_type=jnp.float32)
         + jnp.dot(x2_ref[...].astype(cd), w1b_ref[...].astype(cd),
                   preferred_element_type=jnp.float32)
         + b1_ref[...])
    h = jnp.maximum(h, 0.0)

    # line_2 .. line_4 : Linear -> ReLU -> Dropout(identity in eval)
    for w_ref, b_ref in ((w2_ref, b2_ref), (w3_ref, b3_ref), (w4_ref, b4_ref)):
        h = jnp.dot(h.astype(cd), w_ref[...].astype(cd),
                    preferred_element_type=jnp.float32) + b_ref[...]
        h = jnp.maximum(h, 0.0)

    # line_5 + Softmax(dim=1)   (task == 'cls')
    logits = jnp.dot(h.astype(cd), w5_ref[...].astype(cd),
                     preferred_element_type=jnp.float32) + b5_ref[...]
    m = jnp.max(logits, axis=1, keepdims=True)
    e = jnp.exp(logits - m)
    denom = jnp.sum(e, axis=1, keepdims=True)
    # reciprocal goes to the EUP slot (division would occupy the VALU).
    out_ref[...] = (e * pl.reciprocal(denom, approx=False)).astype(out_ref.dtype)


def mlp_decoder5_forward(x1, x2, params, *, compute_dtype=jnp.float32,
                         batch_tile=None):
    """params = dict with w1..w5 ([in, out]) and b1..b5 ([1, out])."""
    B, feat = x1.shape
    assert x2.shape == (B, feat)
    num_classes = params["w5"].shape[1]

    # Batch tile: multiple of 8 (f32 sublane), capped so activations + weights
    # + double-buffering fit comfortably even in v7x's 64 MiB VMEM.
    if batch_tile is None:
        batch_tile = min(256, _round_up(B, 8))
    bm = _round_up(batch_tile, 8)

    # Pad batch up to a multiple of the tile; padded rows are sliced off after.
    Bp = _round_up(B, bm)
    if Bp != B:
        pad = ((0, Bp - B), (0, 0))
        x1 = jnp.pad(x1, pad)
        x2 = jnp.pad(x2, pad)

    # Split the first-layer weight along its input rows (kills the concat).
    w1a = params["w1"][:feat]
    w1b = params["w1"][feat:]

    weights = (
        w1a, w1b, params["b1"],
        params["w2"], params["b2"],
        params["w3"], params["b3"],
        params["w4"], params["b4"],
        params["w5"], params["b5"],
    )

    def _resident(shape):
        # Grid-invariant block: DMA'd once, stays resident across iterations.
        # Rank is bound explicitly (no late-binding-lambda landmine).
        return pl.BlockSpec(shape, lambda i, _n=len(shape): (0,) * _n)

    act_spec = pl.BlockSpec((bm, feat), lambda i: (i, 0))
    in_specs = [act_spec, act_spec] + [_resident(w.shape) for w in weights]
    out_spec = pl.BlockSpec((bm, num_classes), lambda i: (i, 0))

    kernel = functools.partial(_mlp_decoder5_kernel, compute_dtype=compute_dtype)

    out = pl.pallas_call(
        kernel,
        out_shape=jax.ShapeDtypeStruct((Bp, num_classes), jnp.float32),
        grid=(Bp // bm,),
        in_specs=in_specs,
        out_specs=out_spec,
        compiler_params=pltpu.CompilerParams(
            dimension_semantics=("parallel",)),
    )(x1, x2, *weights)

    return out[:B]


def init_params(key, n_heads, embedding_size, num_classes):
    """Deterministic synthetic init mirroring MLP_Decoder5.__init__ shapes."""
    d_in = 2 * n_heads * embedding_size
    dims = [
        (d_in, 8 * embedding_size),                  # line_1
        (8 * embedding_size, 4 * embedding_size),    # line_2
        (4 * embedding_size, embedding_size // 2),   # line_3
        (embedding_size // 2, embedding_size // 4),  # line_4
        (embedding_size // 4, num_classes),          # line_5 (task='cls')
    ]
    params = {}
    for i, (fan_in, fan_out) in enumerate(dims, start=1):
        key, kw, kb = jax.random.split(key, 3)
        # store weights already transposed: [in, out]
        params[f"w{i}"] = (jax.random.normal(kw, (fan_in, fan_out), jnp.float32)
                           * (1.0 / jnp.sqrt(fan_in)))
        params[f"b{i}"] = (jax.random.normal(kb, (1, fan_out), jnp.float32) * 0.01)
    return params


def reference_forward(x1, x2, params):
    x = jnp.concatenate([x1, x2], axis=1)
    h = x
    for i in range(1, 5):
        h = jnp.maximum(h @ params[f"w{i}"] + params[f"b{i}"], 0.0)
    logits = h @ params["w5"] + params["b5"]
    return jax.nn.softmax(logits, axis=1)


if __name__ == "__main__":
    # Small, module-consistent config.
    n_heads = 4
    embedding_size = 32
    num_classes = 5
    batch = 32

    key = jax.random.PRNGKey(0)
    key, k1, k2, kp = jax.random.split(key, 4)

    feat = n_heads * embedding_size  # each of x1, x2 is [B, n_heads*embedding_size]
    x1 = jax.random.normal(k1, (batch, feat), jnp.float32)
    x2 = jax.random.normal(k2, (batch, feat), jnp.float32)

    params = init_params(kp, n_heads, embedding_size, num_classes)
    ref = reference_forward(x1, x2, params)

    # 1) f32 matmuls, single-tile grid — tight tolerance vs the f32 reference.
    out_f32 = jax.block_until_ready(mlp_decoder5_forward(x1, x2, params))
    assert out_f32.shape == (batch, num_classes)
    assert jnp.allclose(out_f32, ref, atol=1e-5, rtol=1e-5), "f32 mismatch vs reference"
    assert jnp.allclose(jnp.sum(out_f32, axis=1), jnp.ones((batch,)), atol=1e-5)

    # 2) bf16 matmuls (f32 accumulation) with a multi-step batch grid — this
    #    exercises the pipelined/resident-weight path; tolerance relaxed for bf16.
    out_bf16 = jax.block_until_ready(
        mlp_decoder5_forward(x1, x2, params,
                             compute_dtype=jnp.bfloat16, batch_tile=8))
    assert out_bf16.shape == (batch, num_classes)
    assert jnp.allclose(out_bf16, ref, atol=3e-2, rtol=3e-2), "bf16 mismatch vs reference"
    assert jnp.allclose(jnp.sum(out_bf16, axis=1), jnp.ones((batch,)), atol=1e-3)

    print("KERNEL_OK")
</pallas_src>

<mosaic_0001>
module attributes {stable_mosaic.version = 11 : i64} {
  func.func @_mlp_decoder5_kernel(%arg0: i32, %arg1: memref<32x128xf32, #tpu.memory_space<vmem>>, %arg2: memref<32x128xf32, #tpu.memory_space<vmem>>, %arg3: memref<128x256xf32, #tpu.memory_space<vmem>>, %arg4: memref<128x256xf32, #tpu.memory_space<vmem>>, %arg5: memref<1x256xf32, #tpu.memory_space<vmem>>, %arg6: memref<256x128xf32, #tpu.memory_space<vmem>>, %arg7: memref<1x128xf32, #tpu.memory_space<vmem>>, %arg8: memref<128x16xf32, #tpu.memory_space<vmem>>, %arg9: memref<1x16xf32, #tpu.memory_space<vmem>>, %arg10: memref<16x8xf32, #tpu.memory_space<vmem>>, %arg11: memref<1x8xf32, #tpu.memory_space<vmem>>, %arg12: memref<8x5xf32, #tpu.memory_space<vmem>>, %arg13: memref<1x5xf32, #tpu.memory_space<vmem>>, %arg14: memref<32x5xf32, #tpu.memory_space<vmem>>) attributes {dimension_semantics = [#tpu.dimension_semantics<parallel>], iteration_bounds = array<i64: 1>, scalar_prefetch = 0 : i64, scratch_operands = 0 : i64, tpu.core_type = #tpu.core_type<tc>, window_params = [{transform_indices = @transform_0, window_bounds = array<i64: 32, 128>}, {transform_indices = @transform_1, window_bounds = array<i64: 32, 128>}, {pipeline_mode = #tpu.pipeline_mode<synchronous>, transform_indices = @transform_2, window_bounds = array<i64: 128, 256>}, {pipeline_mode = #tpu.pipeline_mode<synchronous>, transform_indices = @transform_3, window_bounds = array<i64: 128, 256>}, {pipeline_mode = #tpu.pipeline_mode<synchronous>, transform_indices = @transform_4, window_bounds = array<i64: 1, 256>}, {pipeline_mode = #tpu.pipeline_mode<synchronous>, transform_indices = @transform_5, window_bounds = array<i64: 256, 128>}, {pipeline_mode = #tpu.pipeline_mode<synchronous>, transform_indices = @transform_6, window_bounds = array<i64: 1, 128>}, {pipeline_mode = #tpu.pipeline_mode<synchronous>, transform_indices = @transform_7, window_bounds = array<i64: 128, 16>}, {pipeline_mode = #tpu.pipeline_mode<synchronous>, transform_indices = @transform_8, window_bounds = array<i64: 1, 16>}, {pipeline_mode = #tpu.pipeline_mode<synchronous>, transform_indices = @transform_9, window_bounds = array<i64: 16, 8>}, {pipeline_mode = #tpu.pipeline_mode<synchronous>, transform_indices = @transform_10, window_bounds = array<i64: 1, 8>}, {pipeline_mode = #tpu.pipeline_mode<synchronous>, transform_indices = @transform_11, window_bounds = array<i64: 8, 5>}, {pipeline_mode = #tpu.pipeline_mode<synchronous>, transform_indices = @transform_12, window_bounds = array<i64: 1, 5>}, {transform_indices = @transform_13, window_bounds = array<i64: 32, 5>}]} {
    %c0 = arith.constant 0 : index
    %c0_0 = arith.constant 0 : index
    %0 = vector.load %arg1[%c0, %c0_0] : memref<32x128xf32, #tpu.memory_space<vmem>>, vector<32x128xf32>
    %c0_1 = arith.constant 0 : index
    %c0_2 = arith.constant 0 : index
    %1 = vector.load %arg3[%c0_1, %c0_2] : memref<128x256xf32, #tpu.memory_space<vmem>>, vector<128x256xf32>
    %cst = arith.constant dense<0.000000e+00> : vector<32x256xf32>
    %2 = tpu.matmul %0, %1, %cst {dimension_numbers = #tpu.dot_dimension_numbers<[1], [0], [0], [1], [0, 0, 1, 1], [], []>} : vector<32x128xf32>, vector<128x256xf32>, vector<32x256xf32> -> vector<32x256xf32>
    %c0_3 = arith.constant 0 : index
    %c0_4 = arith.constant 0 : index
    %3 = vector.load %arg2[%c0_3, %c0_4] : memref<32x128xf32, #tpu.memory_space<vmem>>, vector<32x128xf32>
    %c0_5 = arith.constant 0 : index
    %c0_6 = arith.constant 0 : index
    %4 = vector.load %arg4[%c0_5, %c0_6] : memref<128x256xf32, #tpu.memory_space<vmem>>, vector<128x256xf32>
    %cst_7 = arith.constant dense<0.000000e+00> : vector<32x256xf32>
    %5 = tpu.matmul %3, %4, %cst_7 {dimension_numbers = #tpu.dot_dimension_numbers<[1], [0], [0], [1], [0, 0, 1, 1], [], []>} : vector<32x128xf32>, vector<128x256xf32>, vector<32x256xf32> -> vector<32x256xf32>
    %6 = arith.addf %2, %5 : vector<32x256xf32>
    %c0_8 = arith.constant 0 : index
    %c0_9 = arith.constant 0 : index
    %7 = vector.load %arg5[%c0_8, %c0_9] : memref<1x256xf32, #tpu.memory_space<vmem>>, vector<1x256xf32>
    %8 = vector.broadcast %7 : vector<1x256xf32> to vector<32x256xf32>
    %9 = arith.addf %6, %8 : vector<32x256xf32>
    %cst_10 = arith.constant 0.000000e+00 : f32
    %10 = vector.broadcast %cst_10 : f32 to vector<32x256xf32>
    %11 = arith.maximumf %9, %10 : vector<32x256xf32>
    %c0_11 = arith.constant 0 : index
    %c0_12 = arith.constant 0 : index
    %12 = vector.load %arg6[%c0_11, %c0_12] : memref<256x128xf32, #tpu.memory_space<vmem>>, vector<256x128xf32>
    %cst_13 = arith.constant dense<0.000000e+00> : vector<32x128xf32>
    %13 = tpu.matmul %11, %12, %cst_13 {dimension_numbers = #tpu.dot_dimension_numbers<[1], [0], [0], [1], [0, 0, 1, 1], [], []>} : vector<32x256xf32>, vector<256x128xf32>, vector<32x128xf32> -> vector<32x128xf32>
    %c0_14 = arith.constant 0 : index
    %c0_15 = arith.constant 0 : index
    %14 = vector.load %arg7[%c0_14, %c0_15] : memref<1x128xf32, #tpu.memory_space<vmem>>, vector<1x128xf32>
    %15 = vector.broadcast %14 : vector<1x128xf32> to vector<32x128xf32>
    %16 = arith.addf %13, %15 : vector<32x128xf32>
    %cst_16 = arith.constant 0.000000e+00 : f32
    %17 = vector.broadcast %cst_16 : f32 to vector<32x128xf32>
    %18 = arith.maximumf %16, %17 : vector<32x128xf32>
    %c0_17 = arith.constant 0 : index
    %c0_18 = arith.constant 0 : index
    %19 = vector.load %arg8[%c0_17, %c0_18] : memref<128x16xf32, #tpu.memory_space<vmem>>, vector<128x16xf32>
    %cst_19 = arith.constant dense<0.000000e+00> : vector<32x16xf32>
    %20 = tpu.matmul %18, %19, %cst_19 {dimension_numbers = #tpu.dot_dimension_numbers<[1], [0], [0], [1], [0, 0, 1, 1], [], []>} : vector<32x128xf32>, vector<128x16xf32>, vector<32x16xf32> -> vector<32x16xf32>
    %c0_20 = arith.constant 0 : index
    %c0_21 = arith.constant 0 : index
    %21 = vector.load %arg9[%c0_20, %c0_21] : memref<1x16xf32, #tpu.memory_space<vmem>>, vector<1x16xf32>
    %22 = vector.broadcast %21 : vector<1x16xf32> to vector<32x16xf32>
    %23 = arith.addf %20, %22 : vector<32x16xf32>
    %cst_22 = arith.constant 0.000000e+00 : f32
    %24 = vector.broadcast %cst_22 : f32 to vector<32x16xf32>
    %25 = arith.maximumf %23, %24 : vector<32x16xf32>
    %c0_23 = arith.constant 0 : index
    %c0_24 = arith.constant 0 : index
    %26 = vector.load %arg10[%c0_23, %c0_24] : memref<16x8xf32, #tpu.memory_space<vmem>>, vector<16x8xf32>
    %cst_25 = arith.constant dense<0.000000e+00> : vector<32x8xf32>
    %27 = tpu.matmul %25, %26, %cst_25 {dimension_numbers = #tpu.dot_dimension_numbers<[1], [0], [0], [1], [0, 0, 1, 1], [], []>} : vector<32x16xf32>, vector<16x8xf32>, vector<32x8xf32> -> vector<32x8xf32>
    %c0_26 = arith.constant 0 : index
    %c0_27 = arith.constant 0 : index
    %28 = vector.load %arg11[%c0_26, %c0_27] : memref<1x8xf32, #tpu.memory_space<vmem>>, vector<1x8xf32>
    %29 = vector.broadcast %28 : vector<1x8xf32> to vector<32x8xf32>
    %30 = arith.addf %27, %29 : vector<32x8xf32>
    %cst_28 = arith.constant 0.000000e+00 : f32
    %31 = vector.broadcast %cst_28 : f32 to vector<32x8xf32>
    %32 = arith.maximumf %30, %31 : vector<32x8xf32>
    %c0_29 = arith.constant 0 : index
    %c0_30 = arith.constant 0 : index
    %33 = vector.load %arg12[%c0_29, %c0_30] : memref<8x5xf32, #tpu.memory_space<vmem>>, vector<8x5xf32>
    %cst_31 = arith.constant dense<0.000000e+00> : vector<32x5xf32>
    %34 = tpu.matmul %32, %33, %cst_31 {dimension_numbers = #tpu.dot_dimension_numbers<[1], [0], [0], [1], [0, 0, 1, 1], [], []>} : vector<32x8xf32>, vector<8x5xf32>, vector<32x5xf32> -> vector<32x5xf32>
    %c0_32 = arith.constant 0 : index
    %c0_33 = arith.constant 0 : index
    %35 = vector.load %arg13[%c0_32, %c0_33] : memref<1x5xf32, #tpu.memory_space<vmem>>, vector<1x5xf32>
    %36 = vector.broadcast %35 : vector<1x5xf32> to vector<32x5xf32>
    %37 = arith.addf %34, %36 : vector<32x5xf32>
    %cst_34 = arith.constant dense<0xFF800000> : vector<32xf32>
    %38 = vector.multi_reduction <maximumf>, %37, %cst_34 [1] : vector<32x5xf32> to vector<32xf32>
    %39 = vector.shape_cast %38 : vector<32xf32> to vector<32x1xf32>
    %40 = vector.broadcast %39 : vector<32x1xf32> to vector<32x5xf32>
    %41 = arith.subf %37, %40 : vector<32x5xf32>
    %42 = math.exp %41 : vector<32x5xf32>
    %cst_35 = arith.constant dense<0.000000e+00> : vector<32xf32>
    %43 = vector.multi_reduction <add>, %42, %cst_35 [1] : vector<32x5xf32> to vector<32xf32>
    %44 = vector.shape_cast %43 : vector<32xf32> to vector<32x1xf32>
    %45 = tpu.reciprocal %44 : vector<32x1xf32> -> vector<32x1xf32>
    %46 = vector.broadcast %45 : vector<32x1xf32> to vector<32x5xf32>
    %47 = arith.mulf %42, %46 : vector<32x5xf32>
    %c0_36 = arith.constant 0 : index
    %c0_37 = arith.constant 0 : index
    %48 = vector.load %arg14[%c0_36, %c0_37] : memref<32x5xf32, #tpu.memory_space<vmem>>, vector<32x5xf32>
    tpu.vector_store %arg14[%c0_36, %c0_37], %47 {strides = array<i32>} : memref<32x5xf32, #tpu.memory_space<vmem>>, vector<32x5xf32>,
    return
  }
  func.func @transform_0(%arg0: i32) -> (i32, i32) {
    %c0_i32 = arith.constant 0 : i32
    %c0_i32_0 = arith.constant 0 : i32
    return %arg0, %c0_i32 : i32, i32
  }
  func.func @transform_1(%arg0: i32) -> (i32, i32) {
    %c0_i32 = arith.constant 0 : i32
    %c0_i32_0 = arith.constant 0 : i32
    return %arg0, %c0_i32 : i32, i32
  }
  func.func @transform_2(%arg0: i32) -> (i32, i32) {
    %c0_i32 = arith.constant 0 : i32
    %c0_i32_0 = arith.constant 0 : i32
    %c0_i32_1 = arith.constant 0 : i32
    return %c0_i32, %c0_i32_0 : i32, i32
  }
  func.func @transform_3(%arg0: i32) -> (i32, i32) {
    %c0_i32 = arith.constant 0 : i32
    %c0_i32_0 = arith.constant 0 : i32
    %c0_i32_1 = arith.constant 0 : i32
    return %c0_i32, %c0_i32_0 : i32, i32
  }
  func.func @transform_4(%arg0: i32) -> (i32, i32) {
    %c0_i32 = arith.constant 0 : i32
    %c0_i32_0 = arith.constant 0 : i32
    %c0_i32_1 = arith.constant 0 : i32
    return %c0_i32, %c0_i32_0 : i32, i32
  }
  func.func @transform_5(%arg0: i32) -> (i32, i32) {
    %c0_i32 = arith.constant 0 : i32
    %c0_i32_0 = arith.constant 0 : i32
    %c0_i32_1 = arith.constant 0 : i32
    return %c0_i32, %c0_i32_0 : i32, i32
  }
  func.func @transform_6(%arg0: i32) -> (i32, i32) {
    %c0_i32 = arith.constant 0 : i32
    %c0_i32_0 = arith.constant 0 : i32
    %c0_i32_1 = arith.constant 0 : i32
    return %c0_i32, %c0_i32_0 : i32, i32
  }
  func.func @transform_7(%arg0: i32) -> (i32, i32) {
    %c0_i32 = arith.constant 0 : i32
    %c0_i32_0 = arith.constant 0 : i32
    %c0_i32_1 = arith.constant 0 : i32
    return %c0_i32, %c0_i32_0 : i32, i32
  }
  func.func @transform_8(%arg0: i32) -> (i32, i32) {
    %c0_i32 = arith.constant 0 : i32
    %c0_i32_0 = arith.constant 0 : i32
    %c0_i32_1 = arith.constant 0 : i32
    return %c0_i32, %c0_i32_0 : i32, i32
  }
  func.func @transform_9(%arg0: i32) -> (i32, i32) {
    %c0_i32 = arith.constant 0 : i32
    %c0_i32_0 = arith.constant 0 : i32
    %c0_i32_1 = arith.constant 0 : i32
    return %c0_i32, %c0_i32_0 : i32, i32
  }
  func.func @transform_10(%arg0: i32) -> (i32, i32) {
    %c0_i32 = arith.constant 0 : i32
    %c0_i32_0 = arith.constant 0 : i32
    %c0_i32_1 = arith.constant 0 : i32
    return %c0_i32, %c0_i32_0 : i32, i32
  }
  func.func @transform_11(%arg0: i32) -> (i32, i32) {
    %c0_i32 = arith.constant 0 : i32
    %c0_i32_0 = arith.constant 0 : i32
    %c0_i32_1 = arith.constant 0 : i32
    return %c0_i32, %c0_i32_0 : i32, i32
  }
  func.func @transform_12(%arg0: i32) -> (i32, i32) {
    %c0_i32 = arith.constant 0 : i32
    %c0_i32_0 = arith.constant 0 : i32
    %c0_i32_1 = arith.constant 0 : i32
    return %c0_i32, %c0_i32_0 : i32, i32
  }
  func.func @transform_13(%arg0: i32) -> (i32, i32) {
    %c0_i32 = arith.constant 0 : i32
    %c0_i32_0 = arith.constant 0 : i32
    return %arg0, %c0_i32 : i32, i32
  }
}

</mosaic_0001>

<llo_original>
// kernel: tpu_custom_call.1
$region0: #{tpu_custom_call.1}
  #allocation0 [shape = 'u32[]', space=smem, size = 0x4, offset = 0x4, fixed_abs, tag = 'smem constant byte address 0x4 - core index']
  #allocation1 [shape = 'u32[144,128]{1,0:T(1,128)}', space=vmem, size = 0x12000, scoped, tag = 'internal scratch']
  %s0 = inlined_call_operand.vmem [shape: f32[32,128], index: 0, kind: input, shape index: {}]
  %s1 = inlined_call_operand.vmem [shape: f32[32,128], index: 1, kind: input, shape index: {}]
  %s2 = inlined_call_operand.hbm [shape: f32[128,256], index: 2, kind: input, shape index: {}]
  %s3 = inlined_call_operand.hbm [shape: f32[128,256], index: 3, kind: input, shape index: {}]
  %s4 = inlined_call_operand.vmem [shape: f32[1,256], index: 4, kind: input, shape index: {}]
  %s5 = inlined_call_operand.hbm [shape: f32[256,128], index: 5, kind: input, shape index: {}]
  %s6 = inlined_call_operand.vmem [shape: f32[1,128], index: 6, kind: input, shape index: {}]
  %s7 = inlined_call_operand.vmem [shape: f32[128,16], index: 7, kind: input, shape index: {}]
  %s8 = inlined_call_operand.vmem [shape: f32[1,16], index: 8, kind: input, shape index: {}]
  %s9 = inlined_call_operand.vmem [shape: f32[16,8], index: 9, kind: input, shape index: {}]
  %s10 = inlined_call_operand.vmem [shape: f32[1,8], index: 10, kind: input, shape index: {}]
  %s11 = inlined_call_operand.vmem [shape: f32[8,5], index: 11, kind: input, shape index: {}]
  %s12 = inlined_call_operand.vmem [shape: f32[1,5], index: 12, kind: input, shape index: {}]
  %s13 = inlined_call_operand.vmem [shape: f32[32,5], index: 13, kind: output, shape index: {}]
  %s14 = sld [smem:[#allocation0]]
  $region74: #{tpu_custom_call.1} parent=0
    _
  %s16 = ssub.s32 1, %s14
  %s17 = scalar_select 0, %s16, %s14
  $region1: #{tpu_custom_call.1} parent=0
    #allocation2 [shape = 'u8[131072]{0}', space=vmem, size = 0x20000, scoped, tag = 'input window, operand 2, single buffered']
    #allocation3 [shape = 's32[1]{0}', space=sflag, size = 0x4, scoped, tag = 'scoped memory for tpu_custom_call.1']
    #allocation4 [shape = 'u8[131072]{0}', space=vmem, size = 0x20000, scoped, tag = 'input window, operand 3, single buffered']
    #allocation5 [shape = 's32[1]{0}', space=sflag, size = 0x4, scoped, tag = 'scoped memory for tpu_custom_call.1']
    #allocation6 [shape = 'u8[131072]{0}', space=vmem, size = 0x20000, scoped, tag = 'input window, operand 5, single buffered']
    %18 = vsyncpa [#allocation3], 0
    %19 = vsyncpa [#allocation5], 0
    // Predicated region
    $region2: #{tpu_custom_call.1} parent=1 // pred_check
      _
    $region3: #{tpu_custom_call.1} parent=1 // pred_check_branch
      %21 = sbr.rel (0) target = $region5
    $region4: #{tpu_custom_call.1} parent=1 // pred_region
      _
    $region5: #{tpu_custom_call.1} parent=1 // pred_fallthru
      _
    // Predicated region
    $region6: #{tpu_custom_call.1} parent=1 // pred_check
      _
    $region7: #{tpu_custom_call.1} parent=1 // pred_check_branch
      %23 = sbr.rel (0) target = $region9
    $region8: #{tpu_custom_call.1} parent=1 // pred_region
      _
    $region9: #{tpu_custom_call.1} parent=1 // pred_fallthru
      _
    // Predicated region
    $region10: #{tpu_custom_call.1} parent=1 // pred_check
      _
    $region11: #{tpu_custom_call.1} parent=1 // pred_check_branch
      %25 = sbr.rel (0) target = $region13
    $region12: #{tpu_custom_call.1} parent=1 // pred_region
      %s27 = ssub.s32 4096, 4096
      %28 = vsyncadd [#allocation3], %s27
      %s29 = sshll.u32 [#allocation2], 4
      %s30 = int_to_ptr.vmem [resolvable:$true] %s29
      %35 = dma.hbm_to_vmem [thread:$0]  %s2, 4096, %s30, [#allocation3], 256, 256, 16
    $region13: #{tpu_custom_call.1} parent=1 // pred_fallthru
      _
    // Predicated region
    $region14: #{tpu_custom_call.1} parent=1 // pred_check
      _
    $region15: #{tpu_custom_call.1} parent=1 // pred_check_branch
      %37 = sbr.rel (0) target = $region17
    $region16: #{tpu_custom_call.1} parent=1 // pred_region
      %s39 = ssub.s32 4096, 4096
      %40 = vsyncadd [#allocation5], %s39
      %s41 = sshll.u32 [#allocation4], 4
      %s42 = int_to_ptr.vmem [resolvable:$true] %s41
      %47 = dma.hbm_to_vmem [thread:$0]  %s3, 4096, %s42, [#allocation5], 256, 256, 16
    $region17: #{tpu_custom_call.1} parent=1 // pred_fallthru
      _
    // Predicated region
    $region18: #{tpu_custom_call.1} parent=1 // pred_check
      _
    $region19: #{tpu_custom_call.1} parent=1 // pred_check_branch
      %49 = sbr.rel (0) target = $region21
    $region20: #{tpu_custom_call.1} parent=1 // pred_region
      _
    $region21: #{tpu_custom_call.1} parent=1 // pred_fallthru
      _
    // Predicated region
    $region22: #{tpu_custom_call.1} parent=1 // pred_check
      _
    $region23: #{tpu_custom_call.1} parent=1 // pred_check_branch
      %51 = sbr.rel (0) target = $region25
    $region24: #{tpu_custom_call.1} parent=1 // pred_region
      %s53 = ssub.s32 4096, 4096
      %54 = vsyncadd [#allocation5], %s53
      %s55 = sshll.u32 [#allocation6], 4
      %s56 = int_to_ptr.vmem [resolvable:$true] %s55
      %61 = dma.hbm_to_vmem [thread:$0]  %s5, 4096, %s56, [#allocation5], 128, 128, 8
    $region25: #{tpu_custom_call.1} parent=1 // pred_fallthru
      _
    // Predicated region
    $region26: #{tpu_custom_call.1} parent=1 // pred_check
      _
    $region27: #{tpu_custom_call.1} parent=1 // pred_check_branch
      %63 = sbr.rel (0) target = $region29
    $region28: #{tpu_custom_call.1} parent=1 // pred_region
      _
    $region29: #{tpu_custom_call.1} parent=1 // pred_fallthru
      _
    // Predicated region
    $region30: #{tpu_custom_call.1} parent=1 // pred_check
      _
    $region31: #{tpu_custom_call.1} parent=1 // pred_check_branch
      %65 = sbr.rel (0) target = $region33
    $region32: #{tpu_custom_call.1} parent=1 // pred_region
      _
    $region33: #{tpu_custom_call.1} parent=1 // pred_fallthru
      _
    // Predicated region
    $region34: #{tpu_custom_call.1} parent=1 // pred_check
      _
    $region35: #{tpu_custom_call.1} parent=1 // pred_check_branch
      %67 = sbr.rel (0) target = $region37
    $region36: #{tpu_custom_call.1} parent=1 // pred_region
      _
    $region37: #{tpu_custom_call.1} parent=1 // pred_fallthru
      _
    // Predicated region
    $region38: #{tpu_custom_call.1} parent=1 // pred_check
      _
    $region39: #{tpu_custom_call.1} parent=1 // pred_check_branch
      %69 = sbr.rel (0) target = $region41
    $region40: #{tpu_custom_call.1} parent=1 // pred_region
      _
    $region41: #{tpu_custom_call.1} parent=1 // pred_fallthru
      _
    // Predicated region
    $region42: #{tpu_custom_call.1} parent=1 // pred_check
      _
    $region43: #{tpu_custom_call.1} parent=1 // pred_check_branch
      %71 = sbr.rel (0) target = $region45
    $region44: #{tpu_custom_call.1} parent=1 // pred_region
      _
    $region45: #{tpu_custom_call.1} parent=1 // pred_fallthru
      _
    // Predicated region
    $region46: #{tpu_custom_call.1} parent=1 // pred_check
      _
    $region47: #{tpu_custom_call.1} parent=1 // pred_check_branch
      %73 = sbr.rel (0) target = $region49
    $region48: #{tpu_custom_call.1} parent=1 // pred_region
      _
    $region49: #{tpu_custom_call.1} parent=1 // pred_fallthru
      _
    // Predicated region
    $region50: #{tpu_custom_call.1} parent=1 // pred_check
      _
    $region51: #{tpu_custom_call.1} parent=1 // pred_check_branch
      %75 = sbr.rel (0) target = $region53
    $region52: #{tpu_custom_call.1} parent=1 // pred_region
      _
    $region53: #{tpu_custom_call.1} parent=1 // pred_fallthru
      _
    // Predicated region
    $region54: #{tpu_custom_call.1} parent=1 // pred_check
      _
    $region55: #{tpu_custom_call.1} parent=1 // pred_check_branch
      %77 = sbr.rel (0) target = $region57
    $region56: #{tpu_custom_call.1} parent=1 // pred_region
      %78 = dma.done [#allocation3], 4096
    $region57: #{tpu_custom_call.1} parent=1 // pred_fallthru
      _
    // Predicated region
    $region58: #{tpu_custom_call.1} parent=1 // pred_check
      _
    $region59: #{tpu_custom_call.1} parent=1 // pred_check_branch
      %80 = sbr.rel (0) target = $region61
    $region60: #{tpu_custom_call.1} parent=1 // pred_region
      %81 = dma.done [#allocation5], 4096
    $region61: #{tpu_custom_call.1} parent=1 // pred_fallthru
      _
    // Predicated region
    $region62: #{tpu_custom_call.1} parent=1 // pred_check
      _
    $region63: #{tpu_custom_call.1} parent=1 // pred_check_branch
      %83 = sbr.rel (0) target = $region65
    $region64: #{tpu_custom_call.1} parent=1 // pred_region
      %84 = dma.done [#allocation5], 4096
    $region65: #{tpu_custom_call.1} parent=1 // pred_fallthru
      _
    %v85 = vld [vmem:[%s0] sm:$0xff]
    %v86 = vld [vmem:[%s0 + $0x8] sm:$0xff]
    %v87 = vld [vmem:[%s0 + $0x10] sm:$0xff]
    %v88 = vld [vmem:[%s0 + $0x18] sm:$0xff]
    %v89 = vld [vmem:[#allocation2] sm:$0xff]
    %v90 = vld [vmem:[#allocation2 + $0x8] sm:$0xff]
    %v91 = vld [vmem:[#allocation2 + $0x10] sm:$0xff]
    %v92 = vld [vmem:[#allocation2 + $0x18] sm:$0xff]
    %v93 = vld [vmem:[#allocation2 + $0x20] sm:$0xff]
    %v94 = vld [vmem:[#allocation2 + $0x28] sm:$0xff]
    %v95 = vld [vmem:[#allocation2 + $0x30] sm:$0xff]
    %v96 = vld [vmem:[#allocation2 + $0x38] sm:$0xff]
    %v97 = vld [vmem:[#allocation2 + $0x40] sm:$0xff]
    %v98 = vld [vmem:[#allocation2 + $0x48] sm:$0xff]
    %v99 = vld [vmem:[#allocation2 + $0x50] sm:$0xff]
    %v100 = vld [vmem:[#allocation2 + $0x58] sm:$0xff]
    %v101 = vld [vmem:[#allocation2 + $0x60] sm:$0xff]
    %v102 = vld [vmem:[#allocation2 + $0x68] sm:$0xff]
    %v103 = vld [vmem:[#allocation2 + $0x70] sm:$0xff]
    %v104 = vld [vmem:[#allocation2 + $0x78] sm:$0xff]
    %v105 = vld [vmem:[#allocation2 + $0x80] sm:$0xff]
    %v106 = vld [vmem:[#allocation2 + $0x88] sm:$0xff]
    %v107 = vld [vmem:[#allocation2 + $0x90] sm:$0xff]
    %v108 = vld [vmem:[#allocation2 + $0x98] sm:$0xff]
    %v109 = vld [vmem:[#allocation2 + $0xa0] sm:$0xff]
    %v110 = vld [vmem:[#allocation2 + $0xa8] sm:$0xff]
    %v111 = vld [vmem:[#allocation2 + $0xb0] sm:$0xff]
    %v112 = vld [vmem:[#allocation2 + $0xb8] sm:$0xff]
    %v113 = vld [vmem:[#allocation2 + $0xc0] sm:$0xff]
    %v114 = vld [vmem:[#allocation2 + $0xc8] sm:$0xff]
    %v115 = vld [vmem:[#allocation2 + $0xd0] sm:$0xff]
    %v116 = vld [vmem:[#allocation2 + $0xd8] sm:$0xff]
    %v117 = vld [vmem:[#allocation2 + $0xe0] sm:$0xff]
    %v118 = vld [vmem:[#allocation2 + $0xe8] sm:$0xff]
    %v119 = vld [vmem:[#allocation2 + $0xf0] sm:$0xff]
    %v120 = vld [vmem:[#allocation2 + $0xf8] sm:$0xff]
    %v121 = vld [vmem:[%s1] sm:$0xff]
    %v122 = vld [vmem:[%s1 + $0x8] sm:$0xff]
    %v123 = vld [vmem:[%s1 + $0x10] sm:$0xff]
    %v124 = vld [vmem:[%s1 + $0x18] sm:$0xff]
    %v125 = vld [vmem:[#allocation4] sm:$0xff]
    %v126 = vld [vmem:[#allocation4 + $0x8] sm:$0xff]
    %v127 = vld [vmem:[#allocation4 + $0x10] sm:$0xff]
    %v128 = vld [vmem:[#allocation4 + $0x18] sm:$0xff]
    %v129 = vld [vmem:[#allocation4 + $0x20] sm:$0xff]
    %v130 = vld [vmem:[#allocation4 + $0x28] sm:$0xff]
    %v131 = vld [vmem:[#allocation4 + $0x30] sm:$0xff]
    %v132 = vld [vmem:[#allocation4 + $0x38] sm:$0xff]
    %v133 = vld [vmem:[#allocation4 + $0x40] sm:$0xff]
    %v134 = vld [vmem:[#allocation4 + $0x48] sm:$0xff]
    %v135 = vld [vmem:[#allocation4 + $0x50] sm:$0xff]
    %v136 = vld [vmem:[#allocation4 + $0x58] sm:$0xff]
    %v137 = vld [vmem:[#allocation4 + $0x60] sm:$0xff]
    %v138 = vld [vmem:[#allocation4 + $0x68] sm:$0xff]
    %v139 = vld [vmem:[#allocation4 + $0x70] sm:$0xff]
    %v140 = vld [vmem:[#allocation4 + $0x78] sm:$0xff]
    %v141 = vld [vmem:[#allocation4 + $0x80] sm:$0xff]
    %v142 = vld [vmem:[#allocation4 + $0x88] sm:$0xff]
    %v143 = vld [vmem:[#allocation4 + $0x90] sm:$0xff]
    %v144 = vld [vmem:[#allocation4 + $0x98] sm:$0xff]
    %v145 = vld [vmem:[#allocation4 + $0xa0] sm:$0xff]
    %v146 = vld [vmem:[#allocation4 + $0xa8] sm:$0xff]
    %v147 = vld [vmem:[#allocation4 + $0xb0] sm:$0xff]
    %v148 = vld [vmem:[#allocation4 + $0xb8] sm:$0xff]
    %v149 = vld [vmem:[#allocation4 + $0xc0] sm:$0xff]
    %v150 = vld [vmem:[#allocation4 + $0xc8] sm:$0xff]
    %v151 = vld [vmem:[#allocation4 + $0xd0] sm:$0xff]
    %v152 = vld [vmem:[#allocation4 + $0xd8] sm:$0xff]
    %v153 = vld [vmem:[#allocation4 + $0xe0] sm:$0xff]
    %v154 = vld [vmem:[#allocation4 + $0xe8] sm:$0xff]
    %v155 = vld [vmem:[#allocation4 + $0xf0] sm:$0xff]
    %v156 = vld [vmem:[#allocation4 + $0xf8] sm:$0xff]
    %157 = vmatprep.subr.mxu0 %v156
    %158 = vmatpush1.msra.mxu0 %v155
    %159 = vmatprep.subr.mxu0 %v154
    %160 = vmatpush1.msra.mxu0 %v153
    %161 = vmatprep.subr.mxu0 %v152
    %162 = vmatpush1.msra.mxu0 %v151
    %163 = vmatprep.subr.mxu0 %v150
    %164 = vmatpush1.msra.mxu0 %v149
    %165 = vmatprep.subr.mxu0 %v148
    %166 = vmatpush1.msra.mxu0 %v147
    %167 = vmatprep.subr.mxu0 %v146
    %168 = vmatpush1.msra.mxu0 %v145
    %169 = vmatprep.subr.mxu0 %v144
    %170 = vmatpush1.msra.mxu0 %v143
    %171 = vmatprep.subr.mxu0 %v142
    %172 = vmatpush1.msra.mxu0 %v141
    %173 = vmatprep.subr.mxu0 %v140
    %174 = vmatpush1.msra.mxu0 %v139
    %175 = vmatprep.subr.mxu0 %v138
    %176 = vmatpush1.msra.mxu0 %v137
    %177 = vmatprep.subr.mxu0 %v136
    %178 = vmatpush1.msra.mxu0 %v135
    %179 = vmatprep.subr.mxu0 %v134
    %180 = vmatpush1.msra.mxu0 %v133
    %181 = vmatprep.subr.mxu0 %v132
    %182 = vmatpush1.msra.mxu0 %v131
    %183 = vmatprep.subr.mxu0 %v130
    %184 = vmatpush1.msra.mxu0 %v129
    %185 = vmatprep.subr.mxu0 %v128
    %186 = vmatpush1.msra.mxu0 %v127
    %187 = vmatprep.subr.mxu0 %v126
    %188 = vmatpush1.msra.mxu0 %v125
    %189 = vmatprep.subr.mxu0 0.0
    %190 = vmatpush2.msra.mxu0 0.0
    %191 = vmatprep.subr.mxu0 0.0
    %192 = vmatpush2.msra.mxu0 0.0
    %193 = vmatprep.subr.mxu0 0.0
    %194 = vmatpush2.msra.mxu0 0.0
    %195 = vmatprep.subr.mxu0 0.0
    %196 = vmatpush2.msra.mxu0 0.0
    %197 = vmatprep.subr.mxu0 0.0
    %198 = vmatpush2.msra.mxu0 0.0
    %199 = vmatprep.subr.mxu0 0.0
    %200 = vmatpush2.msra.mxu0 0.0
    %201 = vmatprep.subr.mxu0 0.0
    %202 = vmatpush2.msra.mxu0 0.0
    %203 = vmatprep.subr.mxu0 0.0
    %204 = vmatpush2.msra.mxu0 0.0
    %205 = vmatprep.subr.mxu0 0.0
    %206 = vmatpush2.msra.mxu0 0.0
    %207 = vmatprep.subr.mxu0 0.0
    %208 = vmatpush2.msra.mxu0 0.0
    %209 = vmatprep.subr.mxu0 0.0
    %210 = vmatpush2.msra.mxu0 0.0
    %211 = vmatprep.subr.mxu0 0.0
    %212 = vmatpush2.msra.mxu0 0.0
    %213 = vmatprep.subr.mxu0 0.0
    %214 = vmatpush2.msra.mxu0 0.0
    %215 = vmatprep.subr.mxu0 0.0
    %216 = vmatpush2.msra.mxu0 0.0
    %217 = vmatprep.subr.mxu0 0.0
    %218 = vmatpush2.msra.mxu0 0.0
    %219 = vmatprep.subr.mxu0 0.0
    %220 = vmatpush2.msra.mxu0 0.0
    %221 = vmatprep.mubr.f32.mxu0 0.0
    %222 = vmatmul.mubr.f32.gmra.mxu0 %v121
    %v223 = vpop.f32.mrf.mxu0
    %v224 = vadd.f32 0.0, %v223
    %v225 = vpop.f32.mrf.mxu0
    %v226 = vadd.f32 0.0, %v225
    %227 = vmatprep.mubr.f32.mxu0 0.0
    %228 = vmatmul.mubr.f32.gmra.mxu0 %v122
    %v229 = vpop.f32.mrf.mxu0
    %v230 = vadd.f32 0.0, %v229
    %v231 = vpop.f32.mrf.mxu0
    %v232 = vadd.f32 0.0, %v231
    %233 = vmatprep.mubr.f32.mxu0 0.0
    %234 = vmatmul.mubr.f32.gmra.mxu0 %v123
    %v235 = vpop.f32.mrf.mxu0
    %v236 = vadd.f32 0.0, %v235
    %v237 = vpop.f32.mrf.mxu0
    %v238 = vadd.f32 0.0, %v237
    %239 = vmatprep.mubr.f32.mxu0 0.0
    %240 = vmatmul.mubr.f32.gmra.mxu0 %v124
    %v241 = vpop.f32.mrf.mxu0
    %v242 = vadd.f32 0.0, %v241
    %v243 = vpop.f32.mrf.mxu0
    %v244 = vadd.f32 0.0, %v243
    %245 = vdwg.mxu0
    %246 = vmatprep.subr.mxu0 %v120
    %247 = vmatpush1.msra.mxu0 %v119
    %248 = vmatprep.subr.mxu0 %v118
    %249 = vmatpush1.msra.mxu0 %v117
    %250 = vmatprep.subr.mxu0 %v116
    %251 = vmatpush1.msra.mxu0 %v115
    %252 = vmatprep.subr.mxu0 %v114
    %253 = vmatpush1.msra.mxu0 %v113
    %254 = vmatprep.subr.mxu0 %v112
    %255 = vmatpush1.msra.mxu0 %v111
    %256 = vmatprep.subr.mxu0 %v110
    %257 = vmatpush1.msra.mxu0 %v109
    %258 = vmatprep.subr.mxu0 %v108
    %259 = vmatpush1.msra.mxu0 %v107
    %260 = vmatprep.subr.mxu0 %v106
    %261 = vmatpush1.msra.mxu0 %v105
    %262 = vmatprep.subr.mxu0 %v104
    %263 = vmatpush1.msra.mxu0 %v103
    %264 = vmatprep.subr.mxu0 %v102
    %265 = vmatpush1.msra.mxu0 %v101
    %266 = vmatprep.subr.mxu0 %v100
    %267 = vmatpush1.msra.mxu0 %v99
    %268 = vmatprep.subr.mxu0 %v98
    %269 = vmatpush1.msra.mxu0 %v97
    %270 = vmatprep.subr.mxu0 %v96
    %271 = vmatpush1.msra.mxu0 %v95
    %272 = vmatprep.subr.mxu0 %v94
    %273 = vmatpush1.msra.mxu0 %v93
    %274 = vmatprep.subr.mxu0 %v92
    %275 = vmatpush1.msra.mxu0 %v91
    %276 = vmatprep.subr.mxu0 %v90
    %277 = vmatpush1.msra.mxu0 %v89
    %278 = vmatprep.subr.mxu0 0.0
    %279 = vmatpush2.msra.mxu0 0.0
    %280 = vmatprep.subr.mxu0 0.0
    %281 = vmatpush2.msra.mxu0 0.0
    %282 = vmatprep.subr.mxu0 0.0
    %283 = vmatpush2.msra.mxu0 0.0
    %284 = vmatprep.subr.mxu0 0.0
    %285 = vmatpush2.msra.mxu0 0.0
    %286 = vmatprep.subr.mxu0 0.0
    %287 = vmatpush2.msra.mxu0 0.0
    %288 = vmatprep.subr.mxu0 0.0
    %289 = vmatpush2.msra.mxu0 0.0
    %290 = vmatprep.subr.mxu0 0.0
    %291 = vmatpush2.msra.mxu0 0.0
    %292 = vmatprep.subr.mxu0 0.0
    %293 = vmatpush2.msra.mxu0 0.0
    %294 = vmatprep.subr.mxu0 0.0
    %295 = vmatpush2.msra.mxu0 0.0
    %296 = vmatprep.subr.mxu0 0.0
    %297 = vmatpush2.msra.mxu0 0.0
    %298 = vmatprep.subr.mxu0 0.0
    %299 = vmatpush2.msra.mxu0 0.0
    %300 = vmatprep.subr.mxu0 0.0
    %301 = vmatpush2.msra.mxu0 0.0
    %302 = vmatprep.subr.mxu0 0.0
    %303 = vmatpush2.msra.mxu0 0.0
    %304 = vmatprep.subr.mxu0 0.0
    %305 = vmatpush2.msra.mxu0 0.0
    %306 = vmatprep.subr.mxu0 0.0
    %307 = vmatpush2.msra.mxu0 0.0
    %308 = vmatprep.subr.mxu0 0.0
    %309 = vmatpush2.msra.mxu0 0.0
    %310 = vmatprep.mubr.f32.mxu0 0.0
    %311 = vmatmul.mubr.f32.gmra.mxu0 %v85
    %v312 = vpop.f32.mrf.mxu0
    %v313 = vadd.f32 %v224, %v312
    %v314 = vpop.f32.mrf.mxu0
    %v315 = vadd.f32 %v226, %v314
    %316 = vmatprep.mubr.f32.mxu0 0.0
    %317 = vmatmul.mubr.f32.gmra.mxu0 %v86
    %v318 = vpop.f32.mrf.mxu0
    %v319 = vadd.f32 %v230, %v318
    %v320 = vpop.f32.mrf.mxu0
    %v321 = vadd.f32 %v232, %v320
    %322 = vmatprep.mubr.f32.mxu0 0.0
    %323 = vmatmul.mubr.f32.gmra.mxu0 %v87
    %v324 = vpop.f32.mrf.mxu0
    %v325 = vadd.f32 %v236, %v324
    %v326 = vpop.f32.mrf.mxu0
    %v327 = vadd.f32 %v238, %v326
    %328 = vmatprep.mubr.f32.mxu0 0.0
    %329 = vmatmul.mubr.f32.gmra.mxu0 %v88
    %v330 = vpop.f32.mrf.mxu0
    %v331 = vadd.f32 %v242, %v330
    %v332 = vpop.f32.mrf.mxu0
    %v333 = vadd.f32 %v244, %v332
    %334 = vdwg.mxu0
    %v335 = vld [vmem:[%s4] sm:$0x3]
    %v337 = vlaneseq
    %v338 = vshrl.u32 %v337, 7
    %v339 = vsub.s32 0, %v338
    %v340 = vrot.slane %v335, %v339
    %v341 = vlaneseq
    %v342 = vshrl.u32 %v341, 7
    %v343 = vsub.s32 1, %v342
    %v344 = vrot.slane %v335, %v343
    %v347 = vadd.f32 %v313, %v340
    %v348 = vadd.f32 %v315, %v344
    %v349 = vadd.f32 %v319, %v340
    %v350 = vadd.f32 %v321, %v344
    %v351 = vadd.f32 %v325, %v340
    %v352 = vadd.f32 %v327, %v344
    %v353 = vadd.f32 %v331, %v340
    %v354 = vadd.f32 %v333, %v344
    %v355 = vmax.f32 %v347, 0.0
    %v356 = vmax.f32 %v348, 0.0
    %v357 = vmax.f32 %v349, 0.0
    %v358 = vmax.f32 %v350, 0.0
    %v359 = vmax.f32 %v351, 0.0
    %v360 = vmax.f32 %v352, 0.0
    %v361 = vmax.f32 %v353, 0.0
    %v362 = vmax.f32 %v354, 0.0
    %v363 = vld [vmem:[#allocation6] sm:$0xff]
    %v364 = vld [vmem:[#allocation6 + $0x8] sm:$0xff]
    %v365 = vld [vmem:[#allocation6 + $0x10] sm:$0xff]
    %v366 = vld [vmem:[#allocation6 + $0x18] sm:$0xff]
    %v367 = vld [vmem:[#allocation6 + $0x20] sm:$0xff]
    %v368 = vld [vmem:[#allocation6 + $0x28] sm:$0xff]
    %v369 = vld [vmem:[#allocation6 + $0x30] sm:$0xff]
    %v370 = vld [vmem:[#allocation6 + $0x38] sm:$0xff]
    %v371 = vld [vmem:[#allocation6 + $0x40] sm:$0xff]
    %v372 = vld [vmem:[#allocation6 + $0x48] sm:$0xff]
    %v373 = vld [vmem:[#allocation6 + $0x50] sm:$0xff]
    %v374 = vld [vmem:[#allocation6 + $0x58] sm:$0xff]
    %v375 = vld [vmem:[#allocation6 + $0x60] sm:$0xff]
    %v376 = vld [vmem:[#allocation6 + $0x68] sm:$0xff]
    %v377 = vld [vmem:[#allocation6 + $0x70] sm:$0xff]
    %v378 = vld [vmem:[#allocation6 + $0x78] sm:$0xff]
    %v379 = vld [vmem:[#allocation6 + $0x80] sm:$0xff]
    %v380 = vld [vmem:[#allocation6 + $0x88] sm:$0xff]
    %v381 = vld [vmem:[#allocation6 + $0x90] sm:$0xff]
    %v382 = vld [vmem:[#allocation6 + $0x98] sm:$0xff]
    %v383 = vld [vmem:[#allocation6 + $0xa0] sm:$0xff]
    %v384 = vld [vmem:[#allocation6 + $0xa8] sm:$0xff]
    %v385 = vld [vmem:[#allocation6 + $0xb0] sm:$0xff]
    %v386 = vld [vmem:[#allocation6 + $0xb8] sm:$0xff]
    %v387 = vld [vmem:[#allocation6 + $0xc0] sm:$0xff]
    %v388 = vld [vmem:[#allocation6 + $0xc8] sm:$0xff]
    %v389 = vld [vmem:[#allocation6 + $0xd0] sm:$0xff]
    %v390 = vld [vmem:[#allocation6 + $0xd8] sm:$0xff]
    %v391 = vld [vmem:[#allocation6 + $0xe0] sm:$0xff]
    %v392 = vld [vmem:[#allocation6 + $0xe8] sm:$0xff]
    %v393 = vld [vmem:[#allocation6 + $0xf0] sm:$0xff]
    %v394 = vld [vmem:[#allocation6 + $0xf8] sm:$0xff]
    %v395 = vld [vmem:[%s6] sm:$0x1]
    %v397 = vlaneseq
    %v398 = vshrl.u32 %v397, 7
    %v399 = vsub.s32 0, %v398
    %v400 = vrot.slane %v395, %v399
    %402 = vmatprep.subr.mxu0 0.0
    %403 = vmatpush1.msra.mxu0 %v378
    %404 = vmatprep.subr.mxu0 0.0
    %405 = vmatpush1.msra.mxu0 %v377
    %406 = vmatprep.subr.mxu0 0.0
    %407 = vmatpush1.msra.mxu0 %v376
    %408 = vmatprep.subr.mxu0 0.0
    %409 = vmatpush1.msra.mxu0 %v375
    %410 = vmatprep.subr.mxu0 0.0
    %411 = vmatpush1.msra.mxu0 %v374
    %412 = vmatprep.subr.mxu0 0.0
    %413 = vmatpush1.msra.mxu0 %v373
    %414 = vmatprep.subr.mxu0 0.0
    %415 = vmatpush1.msra.mxu0 %v372
    %416 = vmatprep.subr.mxu0 0.0
    %417 = vmatpush1.msra.mxu0 %v371
    %418 = vmatprep.subr.mxu0 0.0
    %419 = vmatpush1.msra.mxu0 %v370
    %420 = vmatprep.subr.mxu0 0.0
    %421 = vmatpush1.msra.mxu0 %v369
    %422 = vmatprep.subr.mxu0 0.0
    %423 = vmatpush1.msra.mxu0 %v368
    %424 = vmatprep.subr.mxu0 0.0
    %425 = vmatpush1.msra.mxu0 %v367
    %426 = vmatprep.subr.mxu0 0.0
    %427 = vmatpush1.msra.mxu0 %v366
    %428 = vmatprep.subr.mxu0 0.0
    %429 = vmatpush1.msra.mxu0 %v365
    %430 = vmatprep.subr.mxu0 0.0
    %431 = vmatpush1.msra.mxu0 %v364
    %432 = vmatprep.subr.mxu0 0.0
    %433 = vmatpush1.msra.mxu0 %v363
    %434 = vmatprep.subr.mxu0 0.0
    %435 = vmatpush2.msra.mxu0 %v394
    %436 = vmatprep.subr.mxu0 0.0
    %437 = vmatpush2.msra.mxu0 %v393
    %438 = vmatprep.subr.mxu0 0.0
    %439 = vmatpush2.msra.mxu0 %v392
    %440 = vmatprep.subr.mxu0 0.0
    %441 = vmatpush2.msra.mxu0 %v391
    %442 = vmatprep.subr.mxu0 0.0
    %443 = vmatpush2.msra.mxu0 %v390
    %444 = vmatprep.subr.mxu0 0.0
    %445 = vmatpush2.msra.mxu0 %v389
    %446 = vmatprep.subr.mxu0 0.0
    %447 = vmatpush2.msra.mxu0 %v388
    %448 = vmatprep.subr.mxu0 0.0
    %449 = vmatpush2.msra.mxu0 %v387
    %450 = vmatprep.subr.mxu0 0.0
    %451 = vmatpush2.msra.mxu0 %v386
    %452 = vmatprep.subr.mxu0 0.0
    %453 = vmatpush2.msra.mxu0 %v385
    %454 = vmatprep.subr.mxu0 0.0
    %455 = vmatpush2.msra.mxu0 %v384
    %456 = vmatprep.subr.mxu0 0.0
    %457 = vmatpush2.msra.mxu0 %v383
    %458 = vmatprep.subr.mxu0 0.0
    %459 = vmatpush2.msra.mxu0 %v382
    %460 = vmatprep.subr.mxu0 0.0
    %461 = vmatpush2.msra.mxu0 %v381
    %462 = vmatprep.subr.mxu0 0.0
    %463 = vmatpush2.msra.mxu0 %v380
    %464 = vmatprep.subr.mxu0 0.0
    %465 = vmatpush2.msra.mxu0 %v379
    %466 = vmatprep.mubr.f32.mxu0 %v356
    %467 = vmatmul.mubr.f32.gmra.mxu0 %v355
    %v468 = vpop.f32.mrf.mxu0
    %v469 = vadd.f32 %v400, %v468
    %v470 = vpop.f32.mrf.mxu0
    %471 = vmatprep.mubr.f32.mxu0 %v358
    %472 = vmatmul.mubr.f32.gmra.mxu0 %v357
    %v473 = vpop.f32.mrf.mxu0
    %v474 = vadd.f32 %v400, %v473
    %v475 = vpop.f32.mrf.mxu0
    %476 = vmatprep.mubr.f32.mxu0 %v360
    %477 = vmatmul.mubr.f32.gmra.mxu0 %v359
    %v478 = vpop.f32.mrf.mxu0
    %v479 = vadd.f32 %v400, %v478
    %v480 = vpop.f32.mrf.mxu0
    %481 = vmatprep.mubr.f32.mxu0 %v362
    %482 = vmatmul.mubr.f32.gmra.mxu0 %v361
    %v483 = vpop.f32.mrf.mxu0
    %v484 = vadd.f32 %v400, %v483
    %v485 = vpop.f32.mrf.mxu0
    %486 = vdwg.mxu0
    %v487 = vmax.f32 %v469, 0.0
    %v488 = vmax.f32 %v474, 0.0
    %v489 = vmax.f32 %v479, 0.0
    %v490 = vmax.f32 %v484, 0.0
    %v491 = vld [vmem:[%s7] sm:$0xff]
    %v492 = vld [vmem:[%s7 + $0x8] sm:$0xff]
    %v493 = vld [vmem:[%s7 + $0x10] sm:$0xff]
    %v494 = vld [vmem:[%s7 + $0x18] sm:$0xff]
    %v495 = vld [vmem:[%s7 + $0x20] sm:$0xff]
    %v496 = vld [vmem:[%s7 + $0x28] sm:$0xff]
    %v497 = vld [vmem:[%s7 + $0x30] sm:$0xff]
    %v498 = vld [vmem:[%s7 + $0x38] sm:$0xff]
    %v499 = vld [vmem:[%s7 + $0x40] sm:$0xff]
    %v500 = vld [vmem:[%s7 + $0x48] sm:$0xff]
    %v501 = vld [vmem:[%s7 + $0x50] sm:$0xff]
    %v502 = vld [vmem:[%s7 + $0x58] sm:$0xff]
    %v503 = vld [vmem:[%s7 + $0x60] sm:$0xff]
    %v504 = vld [vmem:[%s7 + $0x68] sm:$0xff]
    %v505 = vld [vmem:[%s7 + $0x70] sm:$0xff]
    %v506 = vld [vmem:[%s7 + $0x78] sm:$0xff]
    %v507 = vld [vmem:[%s8] sm:$0x1]
    %v509 = vlaneseq
    %v510 = vshrl.u32 %v509, 7
    %v511 = vsub.s32 0, %v510
    %v512 = vrot.slane %v507, %v511
    %514 = vmatprep.subr.mxu0 0.0
    %515 = vmatpush1.msra.mxu0 %v506
    %516 = vmatprep.subr.mxu0 0.0
    %517 = vmatpush1.msra.mxu0 %v505
    %518 = vmatprep.subr.mxu0 0.0
    %519 = vmatpush1.msra.mxu0 %v504
    %520 = vmatprep.subr.mxu0 0.0
    %521 = vmatpush1.msra.mxu0 %v503
    %522 = vmatprep.subr.mxu0 0.0
    %523 = vmatpush1.msra.mxu0 %v502
    %524 = vmatprep.subr.mxu0 0.0
    %525 = vmatpush1.msra.mxu0 %v501
    %526 = vmatprep.subr.mxu0 0.0
    %527 = vmatpush1.msra.mxu0 %v500
    %528 = vmatprep.subr.mxu0 0.0
    %529 = vmatpush1.msra.mxu0 %v499
    %530 = vmatprep.subr.mxu0 0.0
    %531 = vmatpush1.msra.mxu0 %v498
    %532 = vmatprep.subr.mxu0 0.0
    %533 = vmatpush1.msra.mxu0 %v497
    %534 = vmatprep.subr.mxu0 0.0
    %535 = vmatpush1.msra.mxu0 %v496
    %536 = vmatprep.subr.mxu0 0.0
    %537 = vmatpush1.msra.mxu0 %v495
    %538 = vmatprep.subr.mxu0 0.0
    %539 = vmatpush1.msra.mxu0 %v494
    %540 = vmatprep.subr.mxu0 0.0
    %541 = vmatpush1.msra.mxu0 %v493
    %542 = vmatprep.subr.mxu0 0.0
    %543 = vmatpush1.msra.mxu0 %v492
    %544 = vmatprep.subr.mxu0 0.0
    %545 = vmatpush1.msra.mxu0 %v491
    %546 = vmatprep.subr.mxu0 0.0
    %547 = vmatpush2.msra.mxu0 0.0
    %548 = vmatprep.subr.mxu0 0.0
    %549 = vmatpush2.msra.mxu0 0.0
    %550 = vmatprep.subr.mxu0 0.0
    %551 = vmatpush2.msra.mxu0 0.0
    %552 = vmatprep.subr.mxu0 0.0
    %553 = vmatpush2.msra.mxu0 0.0
    %554 = vmatprep.subr.mxu0 0.0
    %555 = vmatpush2.msra.mxu0 0.0
    %556 = vmatprep.subr.mxu0 0.0
    %557 = vmatpush2.msra.mxu0 0.0
    %558 = vmatprep.subr.mxu0 0.0
    %559 = vmatpush2.msra.mxu0 0.0
    %560 = vmatprep.subr.mxu0 0.0
    %561 = vmatpush2.msra.mxu0 0.0
    %562 = vmatprep.subr.mxu0 0.0
    %563 = vmatpush2.msra.mxu0 0.0
    %564 = vmatprep.subr.mxu0 0.0
    %565 = vmatpush2.msra.mxu0 0.0
    %566 = vmatprep.subr.mxu0 0.0
    %567 = vmatpush2.msra.mxu0 0.0
    %568 = vmatprep.subr.mxu0 0.0
    %569 = vmatpush2.msra.mxu0 0.0
    %570 = vmatprep.subr.mxu0 0.0
    %571 = vmatpush2.msra.mxu0 0.0
    %572 = vmatprep.subr.mxu0 0.0
    %573 = vmatpush2.msra.mxu0 0.0
    %574 = vmatprep.subr.mxu0 0.0
    %575 = vmatpush2.msra.mxu0 0.0
    %576 = vmatprep.subr.mxu0 0.0
    %577 = vmatpush2.msra.mxu0 0.0
    %578 = vmatprep.mubr.f32.mxu0 0.0
    %579 = vmatmul.mubr.f32.gmra.mxu0 %v487
    %v580 = vpop.f32.mrf.mxu0
    %v581 = vadd.f32 %v512, %v580
    %v582 = vpop.f32.mrf.mxu0
    %583 = vmatprep.mubr.f32.mxu0 0.0
    %584 = vmatmul.mubr.f32.gmra.mxu0 %v488
    %v585 = vpop.f32.mrf.mxu0
    %v586 = vadd.f32 %v512, %v585
    %v587 = vpop.f32.mrf.mxu0
    %588 = vmatprep.mubr.f32.mxu0 0.0
    %589 = vmatmul.mubr.f32.gmra.mxu0 %v489
    %v590 = vpop.f32.mrf.mxu0
    %v591 = vadd.f32 %v512, %v590
    %v592 = vpop.f32.mrf.mxu0
    %593 = vmatprep.mubr.f32.mxu0 0.0
    %594 = vmatmul.mubr.f32.gmra.mxu0 %v490
    %v595 = vpop.f32.mrf.mxu0
    %v596 = vadd.f32 %v512, %v595
    %v597 = vpop.f32.mrf.mxu0
    %598 = vdwg.mxu0
    %v599 = vmax.f32 %v581, 0.0
    %v600 = vmax.f32 %v586, 0.0
    %v601 = vmax.f32 %v591, 0.0
    %v602 = vmax.f32 %v596, 0.0
    %v603 = vld [vmem:[%s9] sm:$0xff]
    %v604 = vld [vmem:[%s9 + $0x8] sm:$0xff]
    %v605 = vld [vmem:[%s10] sm:$0x1]
    %v607 = vlaneseq
    %v608 = vshrl.u32 %v607, 7
    %v609 = vsub.s32 0, %v608
    %v610 = vrot.slane %v605, %v609
    %vm612 = vcmask 130048
    %v614 = vsel %vm612, %v599, 0
    %v617 = vsel %vm612, %v600, 0
    %v620 = vsel %vm612, %v601, 0
    %v623 = vsel %vm612, %v602, 0
    %625 = vmatprep.subr.mxu0 0.0
    %626 = vmatpush1.msra.mxu0 0.0
    %627 = vmatprep.subr.mxu0 0.0
    %628 = vmatpush1.msra.mxu0 0.0
    %629 = vmatprep.subr.mxu0 0.0
    %630 = vmatpush1.msra.mxu0 0.0
    %631 = vmatprep.subr.mxu0 0.0
    %632 = vmatpush1.msra.mxu0 0.0
    %633 = vmatprep.subr.mxu0 0.0
    %634 = vmatpush1.msra.mxu0 0.0
    %635 = vmatprep.subr.mxu0 0.0
    %636 = vmatpush1.msra.mxu0 0.0
    %637 = vmatprep.subr.mxu0 0.0
    %638 = vmatpush1.msra.mxu0 0.0
    %639 = vmatprep.subr.mxu0 0.0
    %640 = vmatpush1.msra.mxu0 0.0
    %641 = vmatprep.subr.mxu0 0.0
    %642 = vmatpush1.msra.mxu0 0.0
    %643 = vmatprep.subr.mxu0 0.0
    %644 = vmatpush1.msra.mxu0 0.0
    %645 = vmatprep.subr.mxu0 0.0
    %646 = vmatpush1.msra.mxu0 0.0
    %647 = vmatprep.subr.mxu0 0.0
    %648 = vmatpush1.msra.mxu0 0.0
    %649 = vmatprep.subr.mxu0 0.0
    %650 = vmatpush1.msra.mxu0 0.0
    %651 = vmatprep.subr.mxu0 0.0
    %652 = vmatpush1.msra.mxu0 0.0
    %653 = vmatprep.subr.mxu0 0.0
    %654 = vmatpush1.msra.mxu0 %v604
    %655 = vmatprep.subr.mxu0 0.0
    %656 = vmatpush1.msra.mxu0 %v603
    %657 = vmatprep.subr.mxu0 0.0
    %658 = vmatpush2.msra.mxu0 0.0
    %659 = vmatprep.subr.mxu0 0.0
    %660 = vmatpush2.msra.mxu0 0.0
    %661 = vmatprep.subr.mxu0 0.0
    %662 = vmatpush2.msra.mxu0 0.0
    %663 = vmatprep.subr.mxu0 0.0
    %664 = vmatpush2.msra.mxu0 0.0
    %665 = vmatprep.subr.mxu0 0.0
    %666 = vmatpush2.msra.mxu0 0.0
    %667 = vmatprep.subr.mxu0 0.0
    %668 = vmatpush2.msra.mxu0 0.0
    %669 = vmatprep.subr.mxu0 0.0
    %670 = vmatpush2.msra.mxu0 0.0
    %671 = vmatprep.subr.mxu0 0.0
    %672 = vmatpush2.msra.mxu0 0.0
    %673 = vmatprep.subr.mxu0 0.0
    %674 = vmatpush2.msra.mxu0 0.0
    %675 = vmatprep.subr.mxu0 0.0
    %676 = vmatpush2.msra.mxu0 0.0
    %677 = vmatprep.subr.mxu0 0.0
    %678 = vmatpush2.msra.mxu0 0.0
    %679 = vmatprep.subr.mxu0 0.0
    %680 = vmatpush2.msra.mxu0 0.0
    %681 = vmatprep.subr.mxu0 0.0
    %682 = vmatpush2.msra.mxu0 0.0
    %683 = vmatprep.subr.mxu0 0.0
    %684 = vmatpush2.msra.mxu0 0.0
    %685 = vmatprep.subr.mxu0 0.0
    %686 = vmatpush2.msra.mxu0 0.0
    %687 = vmatprep.subr.mxu0 0.0
    %688 = vmatpush2.msra.mxu0 0.0
    %689 = vmatprep.mubr.f32.mxu0 0.0
    %690 = vmatmul.mubr.f32.gmra.mxu0 %v614
    %v691 = vpop.f32.mrf.mxu0
    %v692 = vadd.f32 %v610, %v691
    %v693 = vpop.f32.mrf.mxu0
    %694 = vmatprep.mubr.f32.mxu0 0.0
    %695 = vmatmul.mubr.f32.gmra.mxu0 %v617
    %v696 = vpop.f32.mrf.mxu0
    %v697 = vadd.f32 %v610, %v696
    %v698 = vpop.f32.mrf.mxu0
    %699 = vmatprep.mubr.f32.mxu0 0.0
    %700 = vmatmul.mubr.f32.gmra.mxu0 %v620
    %v701 = vpop.f32.mrf.mxu0
    %v702 = vadd.f32 %v610, %v701
    %v703 = vpop.f32.mrf.mxu0
    %704 = vmatprep.mubr.f32.mxu0 0.0
    %705 = vmatmul.mubr.f32.gmra.mxu0 %v623
    %v706 = vpop.f32.mrf.mxu0
    %v707 = vadd.f32 %v610, %v706
    %v708 = vpop.f32.mrf.mxu0
    %709 = vdwg.mxu0
    %v710 = vmax.f32 %v692, 0.0
    %v711 = vmax.f32 %v697, 0.0
    %v712 = vmax.f32 %v702, 0.0
    %v713 = vmax.f32 %v707, 0.0
    %v714 = vld [vmem:[%s11] sm:$0xff]
    %v715 = vld [vmem:[%s12] sm:$0x1]
    %v717 = vlaneseq
    %v718 = vshrl.u32 %v717, 7
    %v719 = vsub.s32 0, %v718
    %v720 = vrot.slane %v715, %v719
    %vm722 = vcmask 64512
    %v724 = vsel %vm722, %v710, 0
    %v727 = vsel %vm722, %v711, 0
    %v730 = vsel %vm722, %v712, 0
    %v733 = vsel %vm722, %v713, 0
    %735 = vmatprep.subr.mxu0 0.0
    %736 = vmatpush1.msra.mxu0 0.0
    %737 = vmatprep.subr.mxu0 0.0
    %738 = vmatpush1.msra.mxu0 0.0
    %739 = vmatprep.subr.mxu0 0.0
    %740 = vmatpush1.msra.mxu0 0.0
    %741 = vmatprep.subr.mxu0 0.0
    %742 = vmatpush1.msra.mxu0 0.0
    %743 = vmatprep.subr.mxu0 0.0
    %744 = vmatpush1.msra.mxu0 0.0
    %745 = vmatprep.subr.mxu0 0.0
    %746 = vmatpush1.msra.mxu0 0.0
    %747 = vmatprep.subr.mxu0 0.0
    %748 = vmatpush1.msra.mxu0 0.0
    %749 = vmatprep.subr.mxu0 0.0
    %750 = vmatpush1.msra.mxu0 0.0
    %751 = vmatprep.subr.mxu0 0.0
    %752 = vmatpush1.msra.mxu0 0.0
    %753 = vmatprep.subr.mxu0 0.0
    %754 = vmatpush1.msra.mxu0 0.0
    %755 = vmatprep.subr.mxu0 0.0
    %756 = vmatpush1.msra.mxu0 0.0
    %757 = vmatprep.subr.mxu0 0.0
    %758 = vmatpush1.msra.mxu0 0.0
    %759 = vmatprep.subr.mxu0 0.0
    %760 = vmatpush1.msra.mxu0 0.0
    %761 = vmatprep.subr.mxu0 0.0
    %762 = vmatpush1.msra.mxu0 0.0
    %763 = vmatprep.subr.mxu0 0.0
    %764 = vmatpush1.msra.mxu0 0.0
    %765 = vmatprep.subr.mxu0 0.0
    %766 = vmatpush1.msra.mxu0 %v714
    %767 = vmatprep.subr.mxu0 0.0
    %768 = vmatpush2.msra.mxu0 0.0
    %769 = vmatprep.subr.mxu0 0.0
    %770 = vmatpush2.msra.mxu0 0.0
    %771 = vmatprep.subr.mxu0 0.0
    %772 = vmatpush2.msra.mxu0 0.0
    %773 = vmatprep.subr.mxu0 0.0
    %774 = vmatpush2.msra.mxu0 0.0
    %775 = vmatprep.subr.mxu0 0.0
    %776 = vmatpush2.msra.mxu0 0.0
    %777 = vmatprep.subr.mxu0 0.0
    %778 = vmatpush2.msra.mxu0 0.0
    %779 = vmatprep.subr.mxu0 0.0
    %780 = vmatpush2.msra.mxu0 0.0
    %781 = vmatprep.subr.mxu0 0.0
    %782 = vmatpush2.msra.mxu0 0.0
    %783 = vmatprep.subr.mxu0 0.0
    %784 = vmatpush2.msra.mxu0 0.0
    %785 = vmatprep.subr.mxu0 0.0
    %786 = vmatpush2.msra.mxu0 0.0
    %787 = vmatprep.subr.mxu0 0.0
    %788 = vmatpush2.msra.mxu0 0.0
    %789 = vmatprep.subr.mxu0 0.0
    %790 = vmatpush2.msra.mxu0 0.0
    %791 = vmatprep.subr.mxu0 0.0
    %792 = vmatpush2.msra.mxu0 0.0
    %793 = vmatprep.subr.mxu0 0.0
    %794 = vmatpush2.msra.mxu0 0.0
    %795 = vmatprep.subr.mxu0 0.0
    %796 = vmatpush2.msra.mxu0 0.0
    %797 = vmatprep.subr.mxu0 0.0
    %798 = vmatpush2.msra.mxu0 0.0
    %799 = vmatprep.mubr.f32.mxu0 0.0
    %800 = vmatmul.mubr.f32.gmra.mxu0 %v724
    %v801 = vpop.f32.mrf.mxu0
    %v802 = vadd.f32 %v720, %v801
    %v803 = vpop.f32.mrf.mxu0
    %804 = vmatprep.mubr.f32.mxu0 0.0
    %805 = vmatmul.mubr.f32.gmra.mxu0 %v727
    %v806 = vpop.f32.mrf.mxu0
    %v807 = vadd.f32 %v720, %v806
    %v808 = vpop.f32.mrf.mxu0
    %809 = vmatprep.mubr.f32.mxu0 0.0
    %810 = vmatmul.mubr.f32.gmra.mxu0 %v730
    %v811 = vpop.f32.mrf.mxu0
    %v812 = vadd.f32 %v720, %v811
    %v813 = vpop.f32.mrf.mxu0
    %814 = vmatprep.mubr.f32.mxu0 0.0
    %815 = vmatmul.mubr.f32.gmra.mxu0 %v733
    %v816 = vpop.f32.mrf.mxu0
    %v817 = vadd.f32 %v720, %v816
    %v818 = vpop.f32.mrf.mxu0
    %819 = vdwg.mxu0
    %vm820 = vcmask 39936
    %v821 = vsel %vm820, %v802, -inf
    %822 = vmax.xlane.f32.xlu0 %v821
    %v823 = vpop.xlane.xlu0 %822
    %v824 = vsel %vm820, %v807, -inf
    %825 = vmax.xlane.f32.xlu0 %v824
    %v826 = vpop.xlane.xlu0 %825
    %v827 = vsel %vm820, %v812, -inf
    %828 = vmax.xlane.f32.xlu0 %v827
    %v829 = vpop.xlane.xlu0 %828
    %v830 = vsel %vm820, %v817, -inf
    %831 = vmax.xlane.f32.xlu0 %v830
    %v832 = vpop.xlane.xlu0 %831
    %v833 = vsub.f32 %v802, %v823
    %v834 = vsub.f32 %v807, %v826
    %v835 = vsub.f32 %v812, %v829
    %v836 = vsub.f32 %v817, %v832
    %v837 = vmul.f32 %v833, 1.442695
    %v838 = vpow.pop %v837
    %v839 = vmul.f32 %v834, 1.442695
    %v840 = vpow.pop %v839
    %v841 = vmul.f32 %v835, 1.442695
    %v842 = vpow.pop %v841
    %v843 = vmul.f32 %v836, 1.442695
    %v844 = vpow.pop %v843
    %v845 = vsel %vm820, %v838, 0.0
    %846 = vadd.xlane.f32.xlu0 %v845
    %v847 = vpop.xlane.xlu0 %846
    %v848 = vsel %vm820, %v840, 0.0
    %849 = vadd.xlane.f32.xlu0 %v848
    %v850 = vpop.xlane.xlu0 %849
    %v851 = vsel %vm820, %v842, 0.0
    %852 = vadd.xlane.f32.xlu0 %v851
    %v853 = vpop.xlane.xlu0 %852
    %v854 = vsel %vm820, %v844, 0.0
    %855 = vadd.xlane.f32.xlu0 %v854
    %v856 = vpop.xlane.xlu0 %855
    %v857 = vrcp.pop %v847
    %v858 = vrcp.pop %v850
    %v859 = vrcp.pop %v853
    %v860 = vrcp.pop %v856
    %v861 = vmul.f32 %v838, %v857
    %v862 = vmul.f32 %v840, %v858
    %v863 = vmul.f32 %v842, %v859
    %v864 = vmul.f32 %v844, %v860
    %865 = vst.msk [vmem:[%s13] sm:$0xff] %vm820, %v861
    %866 = vst.msk [vmem:[%s13 + $0x8] sm:$0xff] %vm820, %v862
    %867 = vst.msk [vmem:[%s13 + $0x10] sm:$0xff] %vm820, %v863
    %868 = vst.msk [vmem:[%s13 + $0x18] sm:$0xff] %vm820, %v864
    // Predicated region
    $region66: #{tpu_custom_call.1} parent=1 // pred_check
      _
    $region67: #{tpu_custom_call.1} parent=1 // pred_check_branch
      %870 = sbr.rel (0) target = $region69
    $region68: #{tpu_custom_call.1} parent=1 // pred_region
      _
    $region69: #{tpu_custom_call.1} parent=1 // pred_fallthru
      _
    // Predicated region
    $region70: #{tpu_custom_call.1} parent=1 // pred_check
      _
    $region71: #{tpu_custom_call.1} parent=1 // pred_check_branch
      %872 = sbr.rel (0) target = $region73
    $region72: #{tpu_custom_call.1} parent=1 // pred_region
      _
    $region73: #{tpu_custom_call.1} parent=1 // pred_fallthru
      _
    %873 = vsyncpa [#allocation3], 1
    %874 = vsyncpa [#allocation5], 1

</llo_original>
